<compile_context>
chip_gen: v6e
topology: v6e:2x2x1
jax: 0.10.0
libtpu: 0.0.40
codegen_flags: <defaults>
</compile_context>

<pallas_src>
import jax
import jax.numpy as jnp
from jax.experimental import pallas as pl
from jax.experimental.pallas import tpu as pltpu


def mlp_kernel(x_ref, w0_ref, b0_ref, w1_ref, b1_ref, w2_ref, b2_ref, o_ref):
    """Three Linear(+ReLU) layers followed by log_softmax along dim=1.

    x arrives in its original dtype and is cast to bf16 in-kernel; matmuls
    accumulate in f32; bias-add, ReLU and the log-softmax tail stay f32.
    """
    x = x_ref[...].astype(jnp.bfloat16)  # (TILE_B, image_size)

    h0 = jnp.dot(x, w0_ref[...], preferred_element_type=jnp.float32) + b0_ref[...]
    h0 = jnp.maximum(h0, 0.0).astype(jnp.bfloat16)

    h1 = jnp.dot(h0, w1_ref[...], preferred_element_type=jnp.float32) + b1_ref[...]
    h1 = jnp.maximum(h1, 0.0).astype(jnp.bfloat16)

    h2 = jnp.dot(h1, w2_ref[...], preferred_element_type=jnp.float32) + b2_ref[...]
    # Reference module applies ReLU to the final-layer logits too.
    h2 = jnp.maximum(h2, 0.0)

    # log_softmax(dim=1): numerically stable x - max - log(sum(exp(x - max)))
    m = jnp.max(h2, axis=-1, keepdims=True)
    shifted = h2 - m
    lse = jnp.log(jnp.sum(jnp.exp(shifted), axis=-1, keepdims=True))
    o_ref[...] = (shifted - lse).astype(o_ref.dtype)


def _choose_tile(batch, tile_cap=8192):
    """Pick rows-per-grid-step.

    batch <= 16 : single block equal to the full batch (block == full dim, no
                  sublane-divisibility requirement, no masking).
    batch  > 16 : pick the number of grid steps first (>= 2 so both v7x
                  TensorCores get work; more only if a step would exceed
                  tile_cap rows), then round rows/step up to a multiple of 8.
                  The last block may overhang `batch` by a few rows; Pallas
                  masks those reads/writes, so no wrapper-side pad copy.
    """
    if batch <= 16:
        return batch
    steps = max(2, pl.cdiv(batch, tile_cap))
    return pl.cdiv(pl.cdiv(batch, steps), 8) * 8


def basic_neural_network_forward(x, params, tile_cap=8192):
    """x: any shape whose trailing dims flatten to image_size; params from init_params."""
    w0, b0 = params["w0"], params["b0"]
    w1, b1 = params["w1"], params["b1"]
    w2, b2 = params["w2"], params["b2"]
    image_size = w0.shape[0]
    out_size = w2.shape[1]

    x2d = x.reshape(-1, image_size)  # layout-preserving reshape, no copy
    batch = x2d.shape[0]
    tile = _choose_tile(batch, tile_cap)
    grid = (pl.cdiv(batch, tile),)

    resident = lambda a: pl.BlockSpec(a.shape, lambda i: (0, 0))  # VMEM-resident

    # Advisory cost estimate so XLA schedules neighbors (e.g. the x producer) well.
    flops = 2 * batch * (w0.shape[0] * w0.shape[1]
                         + w1.shape[0] * w1.shape[1]
                         + w2.shape[0] * w2.shape[1])
    param_bytes = sum(int(a.size) * a.dtype.itemsize for a in (w0, b0, w1, b1, w2, b2))
    bytes_accessed = (batch * image_size * x2d.dtype.itemsize
                      + batch * out_size * 4 + param_bytes)

    out = pl.pallas_call(
        mlp_kernel,
        out_shape=jax.ShapeDtypeStruct((batch, out_size), jnp.float32),
        grid=grid,
        in_specs=[
            pl.BlockSpec((tile, image_size), lambda i: (i, 0)),  # x: streamed over batch
            resident(w0), resident(b0),
            resident(w1), resident(b1),
            resident(w2), resident(b2),
        ],
        out_specs=pl.BlockSpec((tile, out_size), lambda i: (i, 0)),
        compiler_params=pltpu.CompilerParams(
            dimension_semantics=("parallel",),        # shards grid across v7x's 2 TCs
            vmem_limit_bytes=48 * 1024 * 1024,        # guardrail for large tiles (v7x)
        ),
        cost_estimate=pl.CostEstimate(
            flops=flops,
            transcendentals=batch * (out_size + 1),
            bytes_accessed=bytes_accessed,
        ),
    )(x2d, w0, b0, w1, b1, w2, b2)

    return out


def init_params(key, image_size, h1, h2, out_size):
    """nn.Linear-style init (uniform +-1/sqrt(fan_in)).

    Weights are stored transposed (in_features, out_features) and pre-cast to
    bf16 ONCE here (no per-call convert); biases stay f32 rows (1, out).
    """
    ks = jax.random.split(key, 6)

    def linear(kw, kb, fan_in, fan_out):
        bound = 1.0 / jnp.sqrt(float(fan_in))
        w = jax.random.uniform(kw, (fan_in, fan_out), jnp.float32, -bound, bound)
        b = jax.random.uniform(kb, (1, fan_out), jnp.float32, -bound, bound)
        return w.astype(jnp.bfloat16), b

    w0, b0 = linear(ks[0], ks[1], image_size, h1)
    w1, b1 = linear(ks[2], ks[3], h1, h2)
    w2, b2 = linear(ks[4], ks[5], h2, out_size)
    return {"w0": w0, "b0": b0, "w1": w1, "b1": b1, "w2": w2, "b2": b2}


def reference_forward(x, params):
    """Pure-JAX f32 reference of the PyTorch module (weights upcast from stored bf16)."""
    image_size = params["w0"].shape[0]
    f32 = lambda a: a.astype(jnp.float32)
    h = x.reshape(-1, image_size).astype(jnp.float32)
    h = jnp.maximum(h @ f32(params["w0"]) + f32(params["b0"]), 0.0)
    h = jnp.maximum(h @ f32(params["w1"]) + f32(params["b1"]), 0.0)
    h = jnp.maximum(h @ f32(params["w2"]) + f32(params["b2"]), 0.0)
    return jax.nn.log_softmax(h, axis=1)


if __name__ == "__main__":
    # Shapes consistent with the module: image_size=64 (8x8 images),
    # hidden1=32, hidden2=32, mnist_output_size=10.
    image_size, h1, h2, out_size = 64, 32, 32, 10

    key = jax.random.PRNGKey(0)
    kx, kx2, kp = jax.random.split(key, 3)
    params = init_params(kp, image_size, h1, h2, out_size)

    # Small case: (batch=2, 1, 8, 8); forward flattens to (-1, image_size).
    batch = 2
    x = jax.random.normal(kx, (batch, 1, 8, 8), jnp.float32)
    out = jax.block_until_ready(basic_neural_network_forward(x, params))
    assert out.shape == (batch, out_size)

    # Sanity 1: log_softmax rows exponentiate-and-sum to ~1.
    row_sums = jnp.sum(jnp.exp(out), axis=1)
    assert bool(jnp.all(jnp.abs(row_sums - 1.0) < 1e-3))
    # Sanity 2: matches pure-JAX f32 reference within bf16 matmul tolerance.
    ref = reference_forward(x, params)
    assert bool(jnp.all(jnp.abs(out - ref) < 5e-2))

    # Larger case: exercises the >=2-step grid and the masked ragged last
    # block (no wrapper-side pad/astype copies of x).
    batch2 = 300
    x2 = jax.random.normal(kx2, (batch2, 1, 8, 8), jnp.float32)
    out2 = jax.block_until_ready(basic_neural_network_forward(x2, params))
    assert out2.shape == (batch2, out_size)
    ref2 = reference_forward(x2, params)
    assert bool(jnp.all(jnp.abs(out2 - ref2) < 5e-2))

    print("KERNEL_OK")
</pallas_src>

<mosaic_0001>
module attributes {stable_mosaic.version = 11 : i64} {
  func.func @mlp_kernel(%arg0: i32, %arg1: memref<2x64xf32, #tpu.memory_space<vmem>>, %arg2: memref<64x32xbf16, #tpu.memory_space<vmem>>, %arg3: memref<1x32xf32, #tpu.memory_space<vmem>>, %arg4: memref<32x32xbf16, #tpu.memory_space<vmem>>, %arg5: memref<1x32xf32, #tpu.memory_space<vmem>>, %arg6: memref<32x10xbf16, #tpu.memory_space<vmem>>, %arg7: memref<1x10xf32, #tpu.memory_space<vmem>>, %arg8: memref<2x10xf32, #tpu.memory_space<vmem>>) attributes {dimension_semantics = [#tpu.dimension_semantics<parallel>], iteration_bounds = array<i64: 1>, scalar_prefetch = 0 : i64, scratch_operands = 0 : i64, tpu.core_type = #tpu.core_type<tc>, window_params = [{transform_indices = @transform_0, window_bounds = array<i64: 2, 64>}, {pipeline_mode = #tpu.pipeline_mode<synchronous>, transform_indices = @transform_1, window_bounds = array<i64: 64, 32>}, {pipeline_mode = #tpu.pipeline_mode<synchronous>, transform_indices = @transform_2, window_bounds = array<i64: 1, 32>}, {pipeline_mode = #tpu.pipeline_mode<synchronous>, transform_indices = @transform_3, window_bounds = array<i64: 32, 32>}, {pipeline_mode = #tpu.pipeline_mode<synchronous>, transform_indices = @transform_4, window_bounds = array<i64: 1, 32>}, {pipeline_mode = #tpu.pipeline_mode<synchronous>, transform_indices = @transform_5, window_bounds = array<i64: 32, 10>}, {pipeline_mode = #tpu.pipeline_mode<synchronous>, transform_indices = @transform_6, window_bounds = array<i64: 1, 10>}, {transform_indices = @transform_7, window_bounds = array<i64: 2, 10>}]} {
    %c0 = arith.constant 0 : index
    %c0_0 = arith.constant 0 : index
    %0 = vector.load %arg1[%c0, %c0_0] : memref<2x64xf32, #tpu.memory_space<vmem>>, vector<2x64xf32>
    %1 = arith.truncf %0 : vector<2x64xf32> to vector<2x64xbf16>
    %c0_1 = arith.constant 0 : index
    %c0_2 = arith.constant 0 : index
    %2 = vector.load %arg2[%c0_1, %c0_2] : memref<64x32xbf16, #tpu.memory_space<vmem>>, vector<64x32xbf16>
    %cst = arith.constant dense<0.000000e+00> : vector<2x32xf32>
    %3 = tpu.matmul %1, %2, %cst {dimension_numbers = #tpu.dot_dimension_numbers<[1], [0], [0], [1], [0, 0, 1, 1], [], []>} : vector<2x64xbf16>, vector<64x32xbf16>, vector<2x32xf32> -> vector<2x32xf32>
    %c0_3 = arith.constant 0 : index
    %c0_4 = arith.constant 0 : index
    %4 = vector.load %arg3[%c0_3, %c0_4] : memref<1x32xf32, #tpu.memory_space<vmem>>, vector<1x32xf32>
    %5 = vector.broadcast %4 : vector<1x32xf32> to vector<2x32xf32>
    %6 = arith.addf %3, %5 : vector<2x32xf32>
    %cst_5 = arith.constant 0.000000e+00 : f32
    %7 = vector.broadcast %cst_5 : f32 to vector<2x32xf32>
    %8 = arith.maximumf %6, %7 : vector<2x32xf32>
    %9 = arith.truncf %8 : vector<2x32xf32> to vector<2x32xbf16>
    %c0_6 = arith.constant 0 : index
    %c0_7 = arith.constant 0 : index
    %10 = vector.load %arg4[%c0_6, %c0_7] : memref<32x32xbf16, #tpu.memory_space<vmem>>, vector<32x32xbf16>
    %cst_8 = arith.constant dense<0.000000e+00> : vector<2x32xf32>
    %11 = tpu.matmul %9, %10, %cst_8 {dimension_numbers = #tpu.dot_dimension_numbers<[1], [0], [0], [1], [0, 0, 1, 1], [], []>} : vector<2x32xbf16>, vector<32x32xbf16>, vector<2x32xf32> -> vector<2x32xf32>
    %c0_9 = arith.constant 0 : index
    %c0_10 = arith.constant 0 : index
    %12 = vector.load %arg5[%c0_9, %c0_10] : memref<1x32xf32, #tpu.memory_space<vmem>>, vector<1x32xf32>
    %13 = vector.broadcast %12 : vector<1x32xf32> to vector<2x32xf32>
    %14 = arith.addf %11, %13 : vector<2x32xf32>
    %cst_11 = arith.constant 0.000000e+00 : f32
    %15 = vector.broadcast %cst_11 : f32 to vector<2x32xf32>
    %16 = arith.maximumf %14, %15 : vector<2x32xf32>
    %17 = arith.truncf %16 : vector<2x32xf32> to vector<2x32xbf16>
    %c0_12 = arith.constant 0 : index
    %c0_13 = arith.constant 0 : index
    %18 = vector.load %arg6[%c0_12, %c0_13] : memref<32x10xbf16, #tpu.memory_space<vmem>>, vector<32x10xbf16>
    %cst_14 = arith.constant dense<0.000000e+00> : vector<2x10xf32>
    %19 = tpu.matmul %17, %18, %cst_14 {dimension_numbers = #tpu.dot_dimension_numbers<[1], [0], [0], [1], [0, 0, 1, 1], [], []>} : vector<2x32xbf16>, vector<32x10xbf16>, vector<2x10xf32> -> vector<2x10xf32>
    %c0_15 = arith.constant 0 : index
    %c0_16 = arith.constant 0 : index
    %20 = vector.load %arg7[%c0_15, %c0_16] : memref<1x10xf32, #tpu.memory_space<vmem>>, vector<1x10xf32>
    %21 = vector.broadcast %20 : vector<1x10xf32> to vector<2x10xf32>
    %22 = arith.addf %19, %21 : vector<2x10xf32>
    %cst_17 = arith.constant 0.000000e+00 : f32
    %23 = vector.broadcast %cst_17 : f32 to vector<2x10xf32>
    %24 = arith.maximumf %22, %23 : vector<2x10xf32>
    %cst_18 = arith.constant dense<0xFF800000> : vector<2xf32>
    %25 = vector.multi_reduction <maximumf>, %24, %cst_18 [1] : vector<2x10xf32> to vector<2xf32>
    %26 = vector.shape_cast %25 : vector<2xf32> to vector<2x1xf32>
    %27 = vector.broadcast %26 : vector<2x1xf32> to vector<2x10xf32>
    %28 = arith.subf %24, %27 : vector<2x10xf32>
    %29 = math.exp %28 : vector<2x10xf32>
    %cst_19 = arith.constant dense<0.000000e+00> : vector<2xf32>
    %30 = vector.multi_reduction <add>, %29, %cst_19 [1] : vector<2x10xf32> to vector<2xf32>
    %31 = vector.shape_cast %30 : vector<2xf32> to vector<2x1xf32>
    %32 = math.log %31 : vector<2x1xf32>
    %33 = vector.broadcast %32 : vector<2x1xf32> to vector<2x10xf32>
    %34 = arith.subf %28, %33 : vector<2x10xf32>
    %c0_20 = arith.constant 0 : index
    %c0_21 = arith.constant 0 : index
    %35 = vector.load %arg8[%c0_20, %c0_21] : memref<2x10xf32, #tpu.memory_space<vmem>>, vector<2x10xf32>
    tpu.vector_store %arg8[%c0_20, %c0_21], %34 {strides = array<i32>} : memref<2x10xf32, #tpu.memory_space<vmem>>, vector<2x10xf32>,
    return
  }
  func.func @transform_0(%arg0: i32) -> (i32, i32) {
    %c0_i32 = arith.constant 0 : i32
    %c0_i32_0 = arith.constant 0 : i32
    return %arg0, %c0_i32 : i32, i32
  }
  func.func @transform_1(%arg0: i32) -> (i32, i32) {
    %c0_i32 = arith.constant 0 : i32
    %c0_i32_0 = arith.constant 0 : i32
    %c0_i32_1 = arith.constant 0 : i32
    return %c0_i32, %c0_i32_0 : i32, i32
  }
  func.func @transform_2(%arg0: i32) -> (i32, i32) {
    %c0_i32 = arith.constant 0 : i32
    %c0_i32_0 = arith.constant 0 : i32
    %c0_i32_1 = arith.constant 0 : i32
    return %c0_i32, %c0_i32_0 : i32, i32
  }
  func.func @transform_3(%arg0: i32) -> (i32, i32) {
    %c0_i32 = arith.constant 0 : i32
    %c0_i32_0 = arith.constant 0 : i32
    %c0_i32_1 = arith.constant 0 : i32
    return %c0_i32, %c0_i32_0 : i32, i32
  }
  func.func @transform_4(%arg0: i32) -> (i32, i32) {
    %c0_i32 = arith.constant 0 : i32
    %c0_i32_0 = arith.constant 0 : i32
    %c0_i32_1 = arith.constant 0 : i32
    return %c0_i32, %c0_i32_0 : i32, i32
  }
  func.func @transform_5(%arg0: i32) -> (i32, i32) {
    %c0_i32 = arith.constant 0 : i32
    %c0_i32_0 = arith.constant 0 : i32
    %c0_i32_1 = arith.constant 0 : i32
    return %c0_i32, %c0_i32_0 : i32, i32
  }
  func.func @transform_6(%arg0: i32) -> (i32, i32) {
    %c0_i32 = arith.constant 0 : i32
    %c0_i32_0 = arith.constant 0 : i32
    %c0_i32_1 = arith.constant 0 : i32
    return %c0_i32, %c0_i32_0 : i32, i32
  }
  func.func @transform_7(%arg0: i32) -> (i32, i32) {
    %c0_i32 = arith.constant 0 : i32
    %c0_i32_0 = arith.constant 0 : i32
    return %arg0, %c0_i32 : i32, i32
  }
}

</mosaic_0001>

<llo_original>
// kernel: tpu_custom_call.1
$region0: #{tpu_custom_call.1}
  #allocation0 [shape = 'u32[]', space=smem, size = 0x4, offset = 0x4, fixed_abs, tag = 'smem constant byte address 0x4 - core index']
  #allocation1 [shape = 'u32[144,128]{1,0:T(1,128)}', space=vmem, size = 0x12000, scoped, tag = 'internal scratch']
  %s0 = inlined_call_operand.vmem [shape: f32[2,64], index: 0, kind: input, shape index: {}]
  %s1 = inlined_call_operand.vmem [shape: bf16[64,32], index: 1, kind: input, shape index: {}]
  %s2 = inlined_call_operand.vmem [shape: f32[1,32], index: 2, kind: input, shape index: {}]
  %s3 = inlined_call_operand.vmem [shape: bf16[32,32], index: 3, kind: input, shape index: {}]
  %s4 = inlined_call_operand.vmem [shape: f32[1,32], index: 4, kind: input, shape index: {}]
  %s5 = inlined_call_operand.vmem [shape: bf16[32,10], index: 5, kind: input, shape index: {}]
  %s6 = inlined_call_operand.vmem [shape: f32[1,10], index: 6, kind: input, shape index: {}]
  %s7 = inlined_call_operand.hbm [shape: f32[2,10], index: 7, kind: output, shape index: {}]
  %s8 = sld [smem:[#allocation0]]
  $region38: #{tpu_custom_call.1} parent=0
    _
  %s10 = ssub.s32 1, %s8
  %s11 = scalar_select 0, %s10, %s8
  $region1: #{tpu_custom_call.1} parent=0
    #allocation2 [shape = 'u8[1024]{0}', space=vmem, size = 0x400, scoped, tag = 'output window, operand 0, single buffered']
    #allocation3 [shape = 's32[1]{0}', space=sflag, size = 0x4, scoped, tag = 'scoped memory for tpu_custom_call.1']
    %12 = vsyncpa [#allocation3], 0
    // Predicated region
    $region2: #{tpu_custom_call.1} parent=1 // pred_check
      _
    $region3: #{tpu_custom_call.1} parent=1 // pred_check_branch
      %14 = sbr.rel (0) target = $region5
    $region4: #{tpu_custom_call.1} parent=1 // pred_region
      _
    $region5: #{tpu_custom_call.1} parent=1 // pred_fallthru
      _
    // Predicated region
    $region6: #{tpu_custom_call.1} parent=1 // pred_check
      _
    $region7: #{tpu_custom_call.1} parent=1 // pred_check_branch
      %16 = sbr.rel (0) target = $region9
    $region8: #{tpu_custom_call.1} parent=1 // pred_region
      _
    $region9: #{tpu_custom_call.1} parent=1 // pred_fallthru
      _
    // Predicated region
    $region10: #{tpu_custom_call.1} parent=1 // pred_check
      _
    $region11: #{tpu_custom_call.1} parent=1 // pred_check_branch
      %18 = sbr.rel (0) target = $region13
    $region12: #{tpu_custom_call.1} parent=1 // pred_region
      _
    $region13: #{tpu_custom_call.1} parent=1 // pred_fallthru
      _
    // Predicated region
    $region14: #{tpu_custom_call.1} parent=1 // pred_check
      _
    $region15: #{tpu_custom_call.1} parent=1 // pred_check_branch
      %20 = sbr.rel (0) target = $region17
    $region16: #{tpu_custom_call.1} parent=1 // pred_region
      _
    $region17: #{tpu_custom_call.1} parent=1 // pred_fallthru
      _
    // Predicated region
    $region18: #{tpu_custom_call.1} parent=1 // pred_check
      _
    $region19: #{tpu_custom_call.1} parent=1 // pred_check_branch
      %22 = sbr.rel (0) target = $region21
    $region20: #{tpu_custom_call.1} parent=1 // pred_region
      _
    $region21: #{tpu_custom_call.1} parent=1 // pred_fallthru
      _
    // Predicated region
    $region22: #{tpu_custom_call.1} parent=1 // pred_check
      _
    $region23: #{tpu_custom_call.1} parent=1 // pred_check_branch
      %24 = sbr.rel (0) target = $region25
    $region24: #{tpu_custom_call.1} parent=1 // pred_region
      _
    $region25: #{tpu_custom_call.1} parent=1 // pred_fallthru
      _
    // Predicated region
    $region26: #{tpu_custom_call.1} parent=1 // pred_check
      _
    $region27: #{tpu_custom_call.1} parent=1 // pred_check_branch
      %26 = sbr.rel (0) target = $region29
    $region28: #{tpu_custom_call.1} parent=1 // pred_region
      _
    $region29: #{tpu_custom_call.1} parent=1 // pred_fallthru
      _
    %v28 = vld [vmem:[%s0] sm:$0x3]
    %v29 = vpack.c.bf16 %v28, %v28
    %v30 = vld [vmem:[%s1] sm:$0xf]
    %v31 = vld [vmem:[%s1 + $0x4] sm:$0xf]
    %v32 = vld [vmem:[%s1 + $0x8] sm:$0xf]
    %v33 = vld [vmem:[%s1 + $0xc] sm:$0xf]
    %v34 = vld [vmem:[%s1 + $0x10] sm:$0xf]
    %v35 = vld [vmem:[%s1 + $0x14] sm:$0xf]
    %v36 = vld [vmem:[%s1 + $0x18] sm:$0xf]
    %v37 = vld [vmem:[%s1 + $0x1c] sm:$0xf]
    %v38 = vld [vmem:[%s2] sm:$0x1]
    %v40 = vlaneseq
    %v41 = vshrl.u32 %v40, 7
    %v42 = vsub.s32 0, %v41
    %v43 = vrot.slane %v38, %v42
    %v53 = vunpack.c.l.b16 %v30
    %v54 = vunpack.c.l.b16 %v31
    %v55 = vunpack.c.l.b16 %v32
    %v56 = vunpack.c.l.b16 %v33
    %v57 = vunpack.c.l.b16 %v34
    %v58 = vunpack.c.l.b16 %v35
    %v59 = vunpack.c.l.b16 %v36
    %v60 = vunpack.c.l.b16 %v37
    %v61 = vpack.c.b16 %v54, %v53
    %v62 = vpack.c.b16 %v56, %v55
    %v63 = vpack.c.b16 %v58, %v57
    %v64 = vpack.c.b16 %v60, %v59
    %vm69 = vcmask 523264
    %v71 = vsel %vm69, %v29, 0
    %73 = vmatprep.subr.bf16.mxu0 0
    %74 = vmatpush1.bf16.msra.mxu0 0
    %75 = vmatprep.subr.bf16.mxu0 0
    %76 = vmatpush1.bf16.msra.mxu0 0
    %77 = vmatprep.subr.bf16.mxu0 0
    %78 = vmatpush1.bf16.msra.mxu0 0
    %79 = vmatprep.subr.bf16.mxu0 0
    %80 = vmatpush1.bf16.msra.mxu0 0
    %81 = vmatprep.subr.bf16.mxu0 0
    %82 = vmatpush1.bf16.msra.mxu0 %v64
    %83 = vmatprep.subr.bf16.mxu0 0
    %84 = vmatpush1.bf16.msra.mxu0 %v63
    %85 = vmatprep.subr.bf16.mxu0 0
    %86 = vmatpush1.bf16.msra.mxu0 %v62
    %87 = vmatprep.subr.bf16.mxu0 0
    %88 = vmatpush1.bf16.msra.mxu0 %v61
    %89 = vmatprep.subr.bf16.mxu0 0
    %90 = vmatpush2.bf16.msra.mxu0 0
    %91 = vmatprep.subr.bf16.mxu0 0
    %92 = vmatpush2.bf16.msra.mxu0 0
    %93 = vmatprep.subr.bf16.mxu0 0
    %94 = vmatpush2.bf16.msra.mxu0 0
    %95 = vmatprep.subr.bf16.mxu0 0
    %96 = vmatpush2.bf16.msra.mxu0 0
    %97 = vmatprep.subr.bf16.mxu0 0
    %98 = vmatpush2.bf16.msra.mxu0 0
    %99 = vmatprep.subr.bf16.mxu0 0
    %100 = vmatpush2.bf16.msra.mxu0 0
    %101 = vmatprep.subr.bf16.mxu0 0
    %102 = vmatpush2.bf16.msra.mxu0 0
    %103 = vmatprep.subr.bf16.mxu0 0
    %104 = vmatpush2.bf16.msra.mxu0 0
    %105 = vmatprep.mubr.bf16.mxu0 0
    %106 = vmatmul.mubr.bf16.gmra.mxu0 %v71
    %v107 = vpop.f32.mrf.mxu0
    %v108 = vadd.f32 %v43, %v107
    %v109 = vpop.f32.mrf.mxu0
    %v110 = vpop.f32.mrf.mxu0
    %v111 = vpop.f32.mrf.mxu0
    %112 = vdwg.mxu0
    %v113 = vmax.f32 %v108, 0.0
    %v114 = vpack.c.bf16 %v113, %v113
    %v115 = vld [vmem:[%s3] sm:$0xf]
    %v116 = vld [vmem:[%s3 + $0x4] sm:$0xf]
    %v117 = vld [vmem:[%s3 + $0x8] sm:$0xf]
    %v118 = vld [vmem:[%s3 + $0xc] sm:$0xf]
    %v119 = vld [vmem:[%s4] sm:$0x1]
    %v121 = vlaneseq
    %v122 = vshrl.u32 %v121, 7
    %v123 = vsub.s32 0, %v122
    %v124 = vrot.slane %v119, %v123
    %v130 = vunpack.c.l.b16 %v115
    %v131 = vunpack.c.l.b16 %v116
    %v132 = vunpack.c.l.b16 %v117
    %v133 = vunpack.c.l.b16 %v118
    %v134 = vpack.c.b16 %v131, %v130
    %v135 = vpack.c.b16 %v133, %v132
    %vm138 = vcmask 261120
    %v140 = vsel %vm138, %v114, 0
    %142 = vmatprep.subr.bf16.mxu0 0
    %143 = vmatpush1.bf16.msra.mxu0 0
    %144 = vmatprep.subr.bf16.mxu0 0
    %145 = vmatpush1.bf16.msra.mxu0 0
    %146 = vmatprep.subr.bf16.mxu0 0
    %147 = vmatpush1.bf16.msra.mxu0 0
    %148 = vmatprep.subr.bf16.mxu0 0
    %149 = vmatpush1.bf16.msra.mxu0 0
    %150 = vmatprep.subr.bf16.mxu0 0
    %151 = vmatpush1.bf16.msra.mxu0 0
    %152 = vmatprep.subr.bf16.mxu0 0
    %153 = vmatpush1.bf16.msra.mxu0 0
    %154 = vmatprep.subr.bf16.mxu0 0
    %155 = vmatpush1.bf16.msra.mxu0 %v135
    %156 = vmatprep.subr.bf16.mxu0 0
    %157 = vmatpush1.bf16.msra.mxu0 %v134
    %158 = vmatprep.subr.bf16.mxu0 0
    %159 = vmatpush2.bf16.msra.mxu0 0
    %160 = vmatprep.subr.bf16.mxu0 0
    %161 = vmatpush2.bf16.msra.mxu0 0
    %162 = vmatprep.subr.bf16.mxu0 0
    %163 = vmatpush2.bf16.msra.mxu0 0
    %164 = vmatprep.subr.bf16.mxu0 0
    %165 = vmatpush2.bf16.msra.mxu0 0
    %166 = vmatprep.subr.bf16.mxu0 0
    %167 = vmatpush2.bf16.msra.mxu0 0
    %168 = vmatprep.subr.bf16.mxu0 0
    %169 = vmatpush2.bf16.msra.mxu0 0
    %170 = vmatprep.subr.bf16.mxu0 0
    %171 = vmatpush2.bf16.msra.mxu0 0
    %172 = vmatprep.subr.bf16.mxu0 0
    %173 = vmatpush2.bf16.msra.mxu0 0
    %174 = vmatprep.mubr.bf16.mxu0 0
    %175 = vmatmul.mubr.bf16.gmra.mxu0 %v140
    %v176 = vpop.f32.mrf.mxu0
    %v177 = vadd.f32 %v124, %v176
    %v178 = vpop.f32.mrf.mxu0
    %v179 = vpop.f32.mrf.mxu0
    %v180 = vpop.f32.mrf.mxu0
    %181 = vdwg.mxu0
    %v182 = vmax.f32 %v177, 0.0
    %v183 = vpack.c.bf16 %v182, %v182
    %v184 = vld [vmem:[%s5] sm:$0xf]
    %v185 = vld [vmem:[%s5 + $0x4] sm:$0xf]
    %v186 = vld [vmem:[%s5 + $0x8] sm:$0xf]
    %v187 = vld [vmem:[%s5 + $0xc] sm:$0xf]
    %v188 = vld [vmem:[%s6] sm:$0x1]
    %v190 = vlaneseq
    %v191 = vshrl.u32 %v190, 7
    %v192 = vsub.s32 0, %v191
    %v193 = vrot.slane %v188, %v192
    %v199 = vunpack.c.l.b16 %v184
    %v200 = vunpack.c.l.b16 %v185
    %v201 = vunpack.c.l.b16 %v186
    %v202 = vunpack.c.l.b16 %v187
    %v203 = vpack.c.b16 %v200, %v199
    %v204 = vpack.c.b16 %v202, %v201
    %v208 = vsel %vm138, %v183, 0
    %210 = vmatprep.subr.bf16.mxu0 0
    %211 = vmatpush1.bf16.msra.mxu0 0
    %212 = vmatprep.subr.bf16.mxu0 0
    %213 = vmatpush1.bf16.msra.mxu0 0
    %214 = vmatprep.subr.bf16.mxu0 0
    %215 = vmatpush1.bf16.msra.mxu0 0
    %216 = vmatprep.subr.bf16.mxu0 0
    %217 = vmatpush1.bf16.msra.mxu0 0
    %218 = vmatprep.subr.bf16.mxu0 0
    %219 = vmatpush1.bf16.msra.mxu0 0
    %220 = vmatprep.subr.bf16.mxu0 0
    %221 = vmatpush1.bf16.msra.mxu0 0
    %222 = vmatprep.subr.bf16.mxu0 0
    %223 = vmatpush1.bf16.msra.mxu0 %v204
    %224 = vmatprep.subr.bf16.mxu0 0
    %225 = vmatpush1.bf16.msra.mxu0 %v203
    %226 = vmatprep.subr.bf16.mxu0 0
    %227 = vmatpush2.bf16.msra.mxu0 0
    %228 = vmatprep.subr.bf16.mxu0 0
    %229 = vmatpush2.bf16.msra.mxu0 0
    %230 = vmatprep.subr.bf16.mxu0 0
    %231 = vmatpush2.bf16.msra.mxu0 0
    %232 = vmatprep.subr.bf16.mxu0 0
    %233 = vmatpush2.bf16.msra.mxu0 0
    %234 = vmatprep.subr.bf16.mxu0 0
    %235 = vmatpush2.bf16.msra.mxu0 0
    %236 = vmatprep.subr.bf16.mxu0 0
    %237 = vmatpush2.bf16.msra.mxu0 0
    %238 = vmatprep.subr.bf16.mxu0 0
    %239 = vmatpush2.bf16.msra.mxu0 0
    %240 = vmatprep.subr.bf16.mxu0 0
    %241 = vmatpush2.bf16.msra.mxu0 0
    %242 = vmatprep.mubr.bf16.mxu0 0
    %243 = vmatmul.mubr.bf16.gmra.mxu0 %v208
    %v244 = vpop.f32.mrf.mxu0
    %v245 = vadd.f32 %v193, %v244
    %v246 = vpop.f32.mrf.mxu0
    %v247 = vpop.f32.mrf.mxu0
    %v248 = vpop.f32.mrf.mxu0
    %249 = vdwg.mxu0
    %v250 = vmax.f32 %v245, 0.0
    %vm251 = vcmask 74752
    %v252 = vsel %vm251, %v250, -inf
    %253 = vmax.xlane.f32.xlu0 %v252
    %v254 = vpop.xlane.xlu0 %253
    %v255 = vsub.f32 %v250, %v254
    %v256 = vmul.f32 %v255, 1.442695
    %v257 = vpow.pop %v256
    %v258 = vsel %vm251, %v257, 0.0
    %259 = vadd.xlane.f32.xlu0 %v258
    %v260 = vpop.xlane.xlu0 %259
    %v261 = vlog2.pop %v260
    %v262 = vmul.f32 %v261, 0.6931472
    %v263 = vsub.f32 %v255, %v262
    %264 = vst.msk [vmem:[#allocation2] sm:$0x3] %vm251, %v263
    // Predicated region
    $region30: #{tpu_custom_call.1} parent=1 // pred_check
      _
    $region31: #{tpu_custom_call.1} parent=1 // pred_check_branch
      %266 = sbr.rel (0) target = $region33
    $region32: #{tpu_custom_call.1} parent=1 // pred_region
      %s268 = ssub.s32 32, 32
      %269 = vsyncadd [#allocation3], %s268
      %s271 = sshll.u32 [#allocation2], 4
      %s272 = int_to_ptr.vmem [resolvable:$true] %s271
      %274 = dma.vmem_to_hbm [thread:$0]  %s272, 32, %s7, [#allocation3]
    $region33: #{tpu_custom_call.1} parent=1 // pred_fallthru
      _
    // Predicated region
    $region34: #{tpu_custom_call.1} parent=1 // pred_check
      _
    $region35: #{tpu_custom_call.1} parent=1 // pred_check_branch
      %276 = sbr.rel (0) target = $region37
    $region36: #{tpu_custom_call.1} parent=1 // pred_region
      %277 = dma.done [#allocation3], 32
    $region37: #{tpu_custom_call.1} parent=1 // pred_fallthru
      _
    %278 = vsyncpa [#allocation3], 1

</llo_original>
